<compile_context>
chip_gen: v6e
topology: v6e:2x2x1
jax: 0.10.0
libtpu: 0.0.40
codegen_flags: <defaults>
</compile_context>

<pallas_src>
import functools

import jax
import jax.numpy as jnp
from jax.experimental import pallas as pl
from jax.experimental.pallas import tpu as pltpu


# --------------------------------------------------------------------------
# Kernel
# --------------------------------------------------------------------------
def _layernorm_kernel(x_ref, p_ref, o_ref, *, eps: float, use_bias: bool,
                      bf16_elementwise: bool):
    """x_ref: (tile_rows, F); p_ref: (1|2, F) = [gamma; beta]; o_ref like x_ref."""
    x = x_ref[...]
    g = p_ref[0:1, :]                      # (1, F), already in compute dtype

    if bf16_elementwise:
        # f32-accumulated row statistics, bf16 center/scale/bias + bf16 store.
        mean = jnp.mean(x, axis=-1, keepdims=True, dtype=jnp.float32)
        xc = x - mean.astype(x.dtype)                       # bf16 elementwise
        # Center first, then square: avoids E[x^2]-E[x]^2 cancellation while
        # keeping the full-block math in bf16 (variance accumulates in f32).
        var = jnp.mean(xc * xc, axis=-1, keepdims=True, dtype=jnp.float32)
        inv = jax.lax.rsqrt(var + eps).astype(x.dtype)      # (T,1) per-row
        out = xc * inv * g
        if use_bias:
            out = out + p_ref[1:2, :]
    else:
        # f32 compute path (f32 inputs, and bf16 inputs on v5e-class chips).
        xf = x.astype(jnp.float32)
        mean = jnp.mean(xf, axis=-1, keepdims=True)
        xc = xf - mean
        # torch.var(..., unbiased=False) == population variance.
        var = jnp.mean(xc * xc, axis=-1, keepdims=True)
        inv = jax.lax.rsqrt(var + eps)
        out = xc * inv * g
        if use_bias:
            out = out + p_ref[1:2, :]

    o_ref[...] = out.astype(o_ref.dtype)


# --------------------------------------------------------------------------
# Heuristics
# --------------------------------------------------------------------------
def _device_kind() -> str:
    try:
        return jax.devices()[0].device_kind.lower()
    except Exception:
        return ""


def _is_v7x(kind: str) -> bool:
    return ("v7" in kind) or ("7x" in kind)


def _has_native_bf16_valu(kind: str) -> bool:
    # v6e/v7x have bf16 VALU; v5e and earlier do not.
    for old in ("v2", "v3", "v4", "v5"):
        if old in kind:
            return False
    return True


def _per_core_vmem_bytes(kind: str) -> int:
    """Physical VMEM per TensorCore, clamped explicitly on v7x."""
    cap = 0
    try:
        info = pltpu.get_tpu_info()
        cap = int(getattr(info, "vmem_capacity_bytes", 0) or 0)
    except Exception:
        cap = 0
    if cap <= 0:
        cap = (64 if _is_v7x(kind) else 128) * 1024 * 1024
    if _is_v7x(kind):
        # get_tpu_info may report per-chip capacity (2 TCs); the per-TC
        # physical VMEM on v7x is 64 MiB.
        cap = min(cap, 64 * 1024 * 1024)
    return cap


def _round_up(n: int, m: int) -> int:
    return ((n + m - 1) // m) * m


_TARGET_BLOCK_BYTES = 16 * 1024 * 1024  # byte-based per-block cap (input bytes)


def _pick_tile_rows(rows: int, features: int, x_itemsize: int,
                    tmp_itemsize: int, budget_bytes: int) -> int:
    """Largest row tile (multiple of the dtype's sublane packing) that fits."""
    # Sub-32-bit dtypes pack 2/4 rows per sublane; keep tiles aligned to that.
    row_mult = 8 * max(1, 4 // x_itemsize)

    # VMEM footprint per tile row: double-buffered input + output blocks in
    # x.dtype plus ~2 compute-dtype in-kernel temporaries (centered value and
    # the scaled value before the store).
    bytes_per_row = features * (4 * x_itemsize + 2 * tmp_itemsize)
    by_vmem = budget_bytes // max(bytes_per_row, 1)
    # Byte-based cap instead of a flat row cap: ~16 MiB of input per block is
    # already deep into the flat part of the measured tile-size/BW curve.
    by_bytes = _TARGET_BLOCK_BYTES // max(features * x_itemsize, 1)
    max_tile = max(row_mult, (min(by_vmem, by_bytes) // row_mult) * row_mult)

    tile = min(max_tile, _round_up(rows, row_mult))

    # Prefer >= 4 grid steps when rows permit so the first load / last store
    # overlap with compute, and an even step count so v7x's two TensorCores
    # split the "parallel" row axis evenly.
    target_steps = 4
    if rows > target_steps * row_mult:
        while tile > row_mult and pl.cdiv(rows, tile) < target_steps:
            tile = max(row_mult, ((tile // 2) // row_mult) * row_mult)
    steps = pl.cdiv(rows, tile)
    if steps >= 2 and steps % 2 == 1 and tile > row_mult:
        cand = max(row_mult, _round_up(pl.cdiv(rows, steps + 1), row_mult))
        if cand < tile and pl.cdiv(rows, cand) % 2 == 0:
            tile = cand
    return tile


# --------------------------------------------------------------------------
# Wrapper
# --------------------------------------------------------------------------
def layer_norm(x: jax.Array, g: jax.Array, b: jax.Array | None = None,
               *, eps: float = 1e-5, tile_rows: int | None = None) -> jax.Array:
    """LayerNorm over the last axis, matching the PyTorch module semantics."""
    orig_shape = x.shape
    features = orig_shape[-1]
    assert g.shape == (features,)
    use_bias = b is not None

    # Flatten all leading dims into a "rows" axis; normalize each row.
    x2 = x.reshape(-1, features)
    rows = x2.shape[0]
    x_itemsize = jnp.dtype(x.dtype).itemsize

    kind = _device_kind()
    bf16_elementwise = (x.dtype == jnp.bfloat16) and _has_native_bf16_valu(kind)
    compute_dtype = jnp.bfloat16 if bf16_elementwise else jnp.float32
    tmp_itemsize = jnp.dtype(compute_dtype).itemsize

    per_core_vmem = _per_core_vmem_bytes(kind)
    vmem_limit = min((per_core_vmem * 3) // 4, 96 * 1024 * 1024)
    if tile_rows is None:
        # ~20% headroom off the requested limit for the param slab and the
        # compiler's internal scratch; the rest goes to the row blocks.
        tile_rows = _pick_tile_rows(rows, features, x_itemsize, tmp_itemsize,
                                    (vmem_limit * 4) // 5)

    grid = (pl.cdiv(rows, tile_rows),)  # ragged last block clipped by Pallas

    row_spec = pl.BlockSpec((tile_rows, features), lambda i: (i, 0))

    # Pack gamma (and beta, only when bias is used) into one (1|2, F) slab,
    # pre-cast to the in-kernel compute dtype (no per-step param cast).
    if use_bias:
        params = jnp.stack([g, b]).astype(compute_dtype)
    else:
        params = g.reshape(1, features).astype(compute_dtype)
    param_spec = pl.BlockSpec(params.shape, lambda i: (0, 0))

    kernel = functools.partial(_layernorm_kernel, eps=float(eps),
                               use_bias=use_bias,
                               bf16_elementwise=bf16_elementwise)

    cost = pl.CostEstimate(
        flops=int(rows) * int(features) * 9,
        transcendentals=int(rows),
        bytes_accessed=int(2 * rows * features * x_itemsize
                           + params.size * tmp_itemsize),
    )

    out = pl.pallas_call(
        kernel,
        out_shape=jax.ShapeDtypeStruct((rows, features), x.dtype),
        grid_spec=pltpu.PrefetchScalarGridSpec(
            num_scalar_prefetch=0,
            grid=grid,
            in_specs=[row_spec, param_spec],
            out_specs=row_spec,
        ),
        compiler_params=pltpu.CompilerParams(
            dimension_semantics=("parallel",),
            vmem_limit_bytes=int(vmem_limit),
        ),
        cost_estimate=cost,
    )(x2, params)

    return out.reshape(orig_shape)


# --------------------------------------------------------------------------
# Reference + self-test
# --------------------------------------------------------------------------
def _reference_layer_norm(x, g, b, eps=1e-5):
    x32 = x.astype(jnp.float32)
    mean = jnp.mean(x32, axis=-1, keepdims=True)
    var = jnp.mean((x32 - mean) ** 2, axis=-1, keepdims=True)
    norm = (x32 - mean) * jax.lax.rsqrt(var + eps) * g.astype(jnp.float32)
    if b is not None:
        norm = norm + b.astype(jnp.float32)
    return norm.astype(x.dtype)


if __name__ == "__main__":
    key = jax.random.PRNGKey(0)
    batch, seq, features = 2, 8, 32

    # Deterministic parameter init, matching nn.Parameter(torch.ones/zeros).
    g = jnp.ones((features,), jnp.float32)
    b = jnp.zeros((features,), jnp.float32)

    x = jax.random.normal(key, (batch, seq, features), jnp.float32)

    # Bias path.
    out = layer_norm(x, g, b, eps=1e-5)
    jax.block_until_ready(out)
    ref = _reference_layer_norm(x, g, b, eps=1e-5)
    assert out.shape == x.shape
    assert jnp.allclose(out, ref, atol=1e-5, rtol=1e-5)

    # No-bias path (only gamma is packed/DMA'd).
    out_nb = layer_norm(x, g, None, eps=1e-5)
    jax.block_until_ready(out_nb)
    ref_nb = _reference_layer_norm(x, g, None, eps=1e-5)
    assert jnp.allclose(out_nb, ref_nb, atol=1e-5, rtol=1e-5)

    # Ragged row count (grid does not divide evenly) exercises the no-pad path.
    key2, key3 = jax.random.split(key)
    x_ragged = jax.random.normal(key2, (3, 5, features), jnp.float32)
    out_r = layer_norm(x_ragged, g, b, eps=1e-5)
    jax.block_until_ready(out_r)
    ref_r = _reference_layer_norm(x_ragged, g, b, eps=1e-5)
    assert out_r.shape == x_ragged.shape
    assert jnp.allclose(out_r, ref_r, atol=1e-5, rtol=1e-5)

    # bf16 inputs exercise the f32-stats / low-precision-elementwise path on
    # v6e/v7x (and the f32 fallback on v5e-class chips).
    x_bf = jax.random.normal(key3, (batch, seq, features),
                             jnp.float32).astype(jnp.bfloat16)
    g_bf = g.astype(jnp.bfloat16)
    b_bf = b.astype(jnp.bfloat16)
    out_bf = layer_norm(x_bf, g_bf, b_bf, eps=1e-5)
    jax.block_until_ready(out_bf)
    ref_bf = _reference_layer_norm(x_bf, g_bf, b_bf, eps=1e-5)
    assert out_bf.shape == x_bf.shape
    assert jnp.allclose(out_bf.astype(jnp.float32), ref_bf.astype(jnp.float32),
                        atol=3e-2, rtol=3e-2)

    print("KERNEL_OK")
</pallas_src>

<mosaic_0001>
module attributes {stable_mosaic.version = 11 : i64} {
  func.func @_layernorm_kernel(%arg0: i32, %arg1: memref<16x32xf32, #tpu.memory_space<vmem>>, %arg2: memref<2x32xf32, #tpu.memory_space<vmem>>, %arg3: memref<16x32xf32, #tpu.memory_space<vmem>>) attributes {dimension_semantics = [#tpu.dimension_semantics<parallel>], iteration_bounds = array<i64: 1>, scalar_prefetch = 0 : i64, scratch_operands = 0 : i64, tpu.core_type = #tpu.core_type<tc>, window_params = [{transform_indices = @transform_0, window_bounds = array<i64: 16, 32>}, {pipeline_mode = #tpu.pipeline_mode<synchronous>, transform_indices = @transform_1, window_bounds = array<i64: 2, 32>}, {transform_indices = @transform_2, window_bounds = array<i64: 16, 32>}]} {
    %c0 = arith.constant 0 : index
    %c0_0 = arith.constant 0 : index
    %0 = vector.load %arg1[%c0, %c0_0] : memref<16x32xf32, #tpu.memory_space<vmem>>, vector<16x32xf32>
    %c0_1 = arith.constant 0 : index
    %c0_2 = arith.constant 0 : index
    %1 = vector.load %arg2[%c0_1, %c0_2] : memref<2x32xf32, #tpu.memory_space<vmem>>, vector<1x32xf32>
    %cst = arith.constant dense<0.000000e+00> : vector<16xf32>
    %2 = vector.multi_reduction <add>, %0, %cst [1] : vector<16x32xf32> to vector<16xf32>
    %3 = vector.shape_cast %2 : vector<16xf32> to vector<16x1xf32>
    %cst_3 = arith.constant 3.200000e+01 : f32
    %4 = vector.broadcast %cst_3 : f32 to vector<16x1xf32>
    %5 = arith.divf %3, %4 : vector<16x1xf32>
    %6 = vector.broadcast %5 : vector<16x1xf32> to vector<16x32xf32>
    %7 = arith.subf %0, %6 : vector<16x32xf32>
    %8 = arith.mulf %7, %7 : vector<16x32xf32>
    %cst_4 = arith.constant dense<0.000000e+00> : vector<16xf32>
    %9 = vector.multi_reduction <add>, %8, %cst_4 [1] : vector<16x32xf32> to vector<16xf32>
    %10 = vector.shape_cast %9 : vector<16xf32> to vector<16x1xf32>
    %cst_5 = arith.constant 3.200000e+01 : f32
    %11 = vector.broadcast %cst_5 : f32 to vector<16x1xf32>
    %12 = arith.divf %10, %11 : vector<16x1xf32>
    %cst_6 = arith.constant 9.99999974E-6 : f32
    %13 = vector.broadcast %cst_6 : f32 to vector<16x1xf32>
    %14 = arith.addf %12, %13 : vector<16x1xf32>
    %15 = math.rsqrt %14 : vector<16x1xf32>
    %16 = vector.broadcast %15 : vector<16x1xf32> to vector<16x32xf32>
    %17 = arith.mulf %7, %16 : vector<16x32xf32>
    %18 = vector.broadcast %1 : vector<1x32xf32> to vector<16x32xf32>
    %19 = arith.mulf %17, %18 : vector<16x32xf32>
    %c1 = arith.constant 1 : index
    %c0_7 = arith.constant 0 : index
    %20 = vector.load %arg2[%c1, %c0_7] : memref<2x32xf32, #tpu.memory_space<vmem>>, vector<1x32xf32>
    %21 = vector.broadcast %20 : vector<1x32xf32> to vector<16x32xf32>
    %22 = arith.addf %19, %21 : vector<16x32xf32>
    %c0_8 = arith.constant 0 : index
    %c0_9 = arith.constant 0 : index
    %23 = vector.load %arg3[%c0_8, %c0_9] : memref<16x32xf32, #tpu.memory_space<vmem>>, vector<16x32xf32>
    tpu.vector_store %arg3[%c0_8, %c0_9], %22 {strides = array<i32>} : memref<16x32xf32, #tpu.memory_space<vmem>>, vector<16x32xf32>,
    return
  }
  func.func @transform_0(%arg0: i32) -> (i32, i32) {
    %c0_i32 = arith.constant 0 : i32
    %c0_i32_0 = arith.constant 0 : i32
    return %arg0, %c0_i32 : i32, i32
  }
  func.func @transform_1(%arg0: i32) -> (i32, i32) {
    %c0_i32 = arith.constant 0 : i32
    %c0_i32_0 = arith.constant 0 : i32
    %c0_i32_1 = arith.constant 0 : i32
    return %c0_i32, %c0_i32_0 : i32, i32
  }
  func.func @transform_2(%arg0: i32) -> (i32, i32) {
    %c0_i32 = arith.constant 0 : i32
    %c0_i32_0 = arith.constant 0 : i32
    return %arg0, %c0_i32 : i32, i32
  }
}

</mosaic_0001>

<llo_original>
// kernel: tpu_custom_call.1
$region0: #{tpu_custom_call.1}
  #allocation0 [shape = 'u32[]', space=smem, size = 0x4, offset = 0x4, fixed_abs, tag = 'smem constant byte address 0x4 - core index']
  #allocation1 [shape = 'u32[144,128]{1,0:T(1,128)}', space=vmem, size = 0x12000, scoped, tag = 'internal scratch']
  %s0 = inlined_call_operand.hbm [shape: f32[16,32], index: 0, kind: input, shape index: {}]
  %s1 = inlined_call_operand.hbm [shape: f32[2,32], index: 1, kind: input, shape index: {}]
  %s2 = inlined_call_operand.hbm [shape: f32[16,32], index: 2, kind: output, shape index: {}]
  %s3 = sld [smem:[#allocation0]]
  $region26: #{tpu_custom_call.1} parent=0
    _
  %s5 = ssub.s32 1, %s3
  %s6 = scalar_select 0, %s5, %s3
  $region1: #{tpu_custom_call.1} parent=0
    #allocation2 [shape = 'u8[8192]{0}', space=vmem, size = 0x2000, scoped, tag = 'input window, operand 0, single buffered']
    #allocation3 [shape = 's32[1]{0}', space=sflag, size = 0x4, scoped, tag = 'scoped memory for tpu_custom_call.1']
    #allocation4 [shape = 's32[1]{0}', space=sflag, size = 0x4, scoped, tag = 'scoped memory for tpu_custom_call.1']
    #allocation5 [shape = 'u8[1024]{0}', space=vmem, size = 0x400, scoped, tag = 'input window, operand 1, single buffered']
    #allocation6 [shape = 's32[1]{0}', space=sflag, size = 0x4, scoped, tag = 'scoped memory for tpu_custom_call.1']
    #allocation7 [shape = 'u8[8192]{0}', space=vmem, size = 0x2000, scoped, tag = 'output window, operand 0, single buffered']
    %7 = vsyncpa [#allocation3], 0
    %8 = vsyncpa [#allocation6], 0
    %9 = vsyncpa [#allocation4], 0
    // Predicated region
    $region2: #{tpu_custom_call.1} parent=1 // pred_check
      _
    $region3: #{tpu_custom_call.1} parent=1 // pred_check_branch
      %11 = sbr.rel (0) target = $region5
    $region4: #{tpu_custom_call.1} parent=1 // pred_region
      %s13 = ssub.s32 256, 256
      %14 = vsyncadd [#allocation3], %s13
      %s15 = sshll.u32 [#allocation2], 4
      %s16 = int_to_ptr.vmem [resolvable:$true] %s15
      %21 = dma.hbm_to_vmem [thread:$0]  %s0, 256, %s16, [#allocation3], 128, 128, 8
    $region5: #{tpu_custom_call.1} parent=1 // pred_fallthru
      _
    // Predicated region
    $region6: #{tpu_custom_call.1} parent=1 // pred_check
      _
    $region7: #{tpu_custom_call.1} parent=1 // pred_check_branch
      %23 = sbr.rel (0) target = $region9
    $region8: #{tpu_custom_call.1} parent=1 // pred_region
      %s25 = ssub.s32 32, 32
      %26 = vsyncadd [#allocation6], %s25
      %s28 = sshll.u32 [#allocation5], 4
      %s29 = int_to_ptr.vmem [resolvable:$true] %s28
      %31 = dma.hbm_to_vmem [thread:$0]  %s1, 32, %s29, [#allocation6]
    $region9: #{tpu_custom_call.1} parent=1 // pred_fallthru
      _
    // Predicated region
    $region10: #{tpu_custom_call.1} parent=1 // pred_check
      _
    $region11: #{tpu_custom_call.1} parent=1 // pred_check_branch
      %33 = sbr.rel (0) target = $region13
    $region12: #{tpu_custom_call.1} parent=1 // pred_region
      %34 = dma.done [#allocation3], 256
    $region13: #{tpu_custom_call.1} parent=1 // pred_fallthru
      _
    // Predicated region
    $region14: #{tpu_custom_call.1} parent=1 // pred_check
      _
    $region15: #{tpu_custom_call.1} parent=1 // pred_check_branch
      %36 = sbr.rel (0) target = $region17
    $region16: #{tpu_custom_call.1} parent=1 // pred_region
      %37 = dma.done [#allocation6], 32
    $region17: #{tpu_custom_call.1} parent=1 // pred_fallthru
      _
    %v38 = vld [vmem:[#allocation2] sm:$0xff]
    %v39 = vld [vmem:[#allocation2 + $0x8] sm:$0xff]
    %v40 = vld [vmem:[#allocation5] sm:$0x1]
    %vm41 = vcmask 261120
    %v42 = vsel %vm41, %v38, 0.0
    %43 = vadd.xlane.f32.xlu0 %v42
    %v44 = vpop.xlane.xlu0 %43
    %v45 = vsel %vm41, %v39, 0.0
    %46 = vadd.xlane.f32.xlu0 %v45
    %v47 = vpop.xlane.xlu0 %46
    %v48 = vrcp.pop 32.0
    %v49 = vmul.f32 %v44, %v48
    %v50 = vmul.f32 %v47, %v48
    %v51 = vsub.f32 %v38, %v49
    %v52 = vsub.f32 %v39, %v50
    %v53 = vmul.f32 %v51, %v51
    %v54 = vmul.f32 %v52, %v52
    %v55 = vsel %vm41, %v53, 0.0
    %56 = vadd.xlane.f32.xlu0 %v55
    %v57 = vpop.xlane.xlu0 %56
    %v58 = vsel %vm41, %v54, 0.0
    %59 = vadd.xlane.f32.xlu0 %v58
    %v60 = vpop.xlane.xlu0 %59
    %v61 = vmul.f32 %v57, %v48
    %v62 = vmul.f32 %v60, %v48
    %v63 = vadd.f32 %v61, 1e-05
    %v64 = vadd.f32 %v62, 1e-05
    %v65 = vrsqrt.pop %v63
    %v66 = vrsqrt.pop %v64
    %v67 = vmul.f32 %v51, %v65
    %v68 = vmul.f32 %v52, %v66
    %v69 = vlaneseq
    %v70 = vshrl.u32 %v69, 7
    %v71 = vsub.s32 0, %v70
    %v72 = vrot.slane %v40, %v71
    %v73 = vmul.f32 %v67, %v72
    %v74 = vmul.f32 %v68, %v72
    %v75 = vld [vmem:[#allocation5 + $0x1] sm:$0x1]
    %v76 = vlaneseq
    %v77 = vshrl.u32 %v76, 7
    %v78 = vsub.s32 0, %v77
    %v79 = vrot.slane %v75, %v78
    %v80 = vadd.f32 %v73, %v79
    %v81 = vadd.f32 %v74, %v79
    %82 = vst.msk [vmem:[#allocation7] sm:$0xff] %vm41, %v80
    %83 = vst.msk [vmem:[#allocation7 + $0x8] sm:$0xff] %vm41, %v81
    // Predicated region
    $region18: #{tpu_custom_call.1} parent=1 // pred_check
      _
    $region19: #{tpu_custom_call.1} parent=1 // pred_check_branch
      %85 = sbr.rel (0) target = $region21
    $region20: #{tpu_custom_call.1} parent=1 // pred_region
      %s87 = ssub.s32 256, 256
      %88 = vsyncadd [#allocation4], %s87
      %s89 = sshll.u32 [#allocation7], 4
      %s90 = int_to_ptr.vmem [resolvable:$true] %s89
      %95 = dma.vmem_to_hbm [thread:$0]  %s90, 256, %s2, [#allocation4], 128, 128, 8
    $region21: #{tpu_custom_call.1} parent=1 // pred_fallthru
      _
    // Predicated region
    $region22: #{tpu_custom_call.1} parent=1 // pred_check
      _
    $region23: #{tpu_custom_call.1} parent=1 // pred_check_branch
      %97 = sbr.rel (0) target = $region25
    $region24: #{tpu_custom_call.1} parent=1 // pred_region
      %98 = dma.done [#allocation4], 256
    $region25: #{tpu_custom_call.1} parent=1 // pred_fallthru
      _
    %99 = vsyncpa [#allocation3], 1
    %100 = vsyncpa [#allocation6], 1
    %101 = vsyncpa [#allocation4], 1

</llo_original>
